<compile_context>
chip_gen: v5e
topology: v5e:2x2
jax: 0.10.0
libtpu: 0.0.40
codegen_flags: <defaults>
</compile_context>

<pallas_src>
import jax
import jax.numpy as jnp
from jax.experimental import pallas as pl
from jax.experimental.pallas import tpu as pltpu


def _round_up(v: int, m: int) -> int:
    return ((v + m - 1) // m) * m


def _sanitize_tile(t: int) -> int:
    # Keep user-provided tiles lane-aligned (multiple of 128, >= 128).
    return max(128, _round_up(int(t), 128))


def _vmem_capacity_bytes() -> int:
    try:
        info = pltpu.get_tpu_info()
        cap = getattr(info, "vmem_capacity_bytes", None)
        if cap:
            return int(cap)
    except Exception:
        pass
    return 64 * 1024 * 1024  # conservative: assume the smallest (v7x-class) VMEM


def _divisor_tile(dim128: int, cap: int) -> int:
    """Largest multiple of 128 <= cap that evenly divides dim128 (a 128-multiple)."""
    if dim128 <= cap:
        return dim128
    units = dim128 // 128
    cap_units = max(1, cap // 128)
    for t in range(cap_units, 0, -1):
        if units % t == 0:
            return t * 128
    return 128


def _readout_kernel(bidx_ref, inv_cnt_ref, x_ref, o_ref, acc_ref):
    # bidx_ref:    (1, TILE_N) int32      graph id per node in this N tile
    # inv_cnt_ref: (B_pad, 1)  float32    1 / nodes-per-graph (inf if empty)
    # x_ref:       (TILE_N, TILE_F)       node features, native dtype
    # o_ref:       (B_pad, TILE_F)        output tile (written at k == last)
    # acc_ref:     (B_pad, TILE_F) f32    running segment sums
    k = pl.program_id(1)

    @pl.when(k == 0)
    def _init():
        acc_ref[...] = jnp.zeros_like(acc_ref)

    bidx = bidx_ref[...]                                     # (1, TILE_N)
    b_pad, tile_n = acc_ref.shape[0], bidx.shape[1]
    graph_ids = jax.lax.broadcasted_iota(jnp.int32, (b_pad, tile_n), 0)
    mask = (graph_ids == bidx).astype(x_ref.dtype)           # exact 0/1, single cast

    # Segment sums on the MXU; accumulation stays f32.
    acc_ref[...] += jnp.dot(mask, x_ref[...], preferred_element_type=jnp.float32)

    @pl.when(k == pl.num_programs(1) - 1)
    def _finalize():
        # Mean = sum * (1/count); empty graphs give 0 * inf = NaN (torch parity).
        o_ref[...] = (acc_ref[...] * inv_cnt_ref[...]).astype(o_ref.dtype)


def readout(x: jax.Array, batch_index: jax.Array, num_graphs: int,
            *, tile_n: int | None = None, tile_f: int | None = None) -> jax.Array:
    """Pallas implementation of ReadOut.forward.

    x:           [N, F] (float32 or bfloat16)
    batch_index: [N]    int (values in [0, num_graphs)); out-of-range ids dropped.
    returns:     [num_graphs, F] in x.dtype (empty graphs -> NaN rows).
    """
    N, F = x.shape
    itemsize = jnp.dtype(x.dtype).itemsize

    # ---- per-generation budgets -------------------------------------------
    vmem_cap = _vmem_capacity_bytes()
    big_vmem = vmem_cap >= 96 * 1024 * 1024        # v5e / v6e: 128 MiB, 1 TC
    two_cores = not big_vmem                        # v7x-class: 64 MiB, 2 TCs
    vmem_limit = (80 if big_vmem else 48) * 1024 * 1024
    cap_n = _sanitize_tile(tile_n) if tile_n is not None else (2048 if big_vmem else 1024)
    cap_f = _sanitize_tile(tile_f) if tile_f is not None else (2048 if big_vmem else 1024)

    # Keep the double-buffered x tiles within ~60% of the scoped VMEM limit.
    while 2 * cap_n * cap_f * itemsize > int(vmem_limit * 0.6) and max(cap_n, cap_f) > 128:
        if cap_n >= cap_f:
            cap_n = max(128, (cap_n // 2 // 128) * 128)
        else:
            cap_f = max(128, (cap_f // 2 // 128) * 128)

    # ---- pad only to 128 multiples (no tile-multiple padding traffic) ------
    b_pad = max(8, _round_up(num_graphs, 8))
    n128 = max(128, _round_up(N, 128))
    f128 = max(128, _round_up(F, 128))

    # Keep accumulator + double-buffered output tiles bounded for large num_graphs.
    while b_pad * cap_f * (4 + 2 * itemsize) > vmem_limit // 4 and cap_f > 128:
        cap_f = max(128, (cap_f // 2 // 128) * 128)

    tile_n_eff = _divisor_tile(n128, cap_n)
    tile_f_eff = _divisor_tile(f128, cap_f)

    # On 2-TensorCore parts, guarantee >= 2 tiles along the "parallel" F axis.
    if two_cores and tile_f is None and f128 // tile_f_eff == 1 and f128 >= 256:
        tile_f_eff = _divisor_tile(f128, max(128, (f128 // 2 // 128) * 128))

    num_n_tiles = n128 // tile_n_eff
    num_f_tiles = f128 // tile_f_eff

    # ---- wrapper-side padding & precomputed inverse counts -----------------
    x_pad = x if (n128, f128) == (N, F) else jnp.pad(x, ((0, n128 - N), (0, f128 - F)))

    bidx = batch_index.astype(jnp.int32)
    # Sentinel id b_pad never matches any one-hot row -> padded nodes ignored.
    bidx_pad = bidx if n128 == N else jnp.pad(bidx, (0, n128 - N), constant_values=b_pad)
    bidx2d = bidx_pad.reshape(1, n128)

    # Counts depend only on batch_index: compute once here (not per grid step).
    valid = (bidx >= 0) & (bidx < num_graphs)
    counts = jnp.zeros((b_pad,), jnp.float32).at[jnp.where(valid, bidx, 0)].add(
        valid.astype(jnp.float32))
    inv_counts = (1.0 / counts).reshape(b_pad, 1)   # empty graph -> inf

    # ---- build the pallas_call ---------------------------------------------
    x_tile_bytes = tile_n_eff * tile_f_eff * itemsize
    want_third_buffer = (x_tile_bytes <= 4 * 1024 * 1024) and num_n_tiles >= 3

    def _x_index_map(j, k):
        return (k, j)

    def _build_call(extra_buffer: bool):
        if extra_buffer:
            x_spec = pl.BlockSpec((tile_n_eff, tile_f_eff), _x_index_map,
                                  pipeline_mode=pl.Buffered(3))
        else:
            x_spec = pl.BlockSpec((tile_n_eff, tile_f_eff), _x_index_map)
        return pl.pallas_call(
            _readout_kernel,
            out_shape=jax.ShapeDtypeStruct((b_pad, f128), x.dtype),
            grid_spec=pltpu.PrefetchScalarGridSpec(
                num_scalar_prefetch=0,
                grid=(num_f_tiles, num_n_tiles),       # F parallel, N (reduction) last
                in_specs=[
                    pl.BlockSpec((1, tile_n_eff), lambda j, k: (0, k)),    # batch ids
                    pl.BlockSpec((b_pad, 1), lambda j, k: (0, 0)),         # 1/counts
                    x_spec,                                                 # x tile
                ],
                out_specs=pl.BlockSpec((b_pad, tile_f_eff), lambda j, k: (0, j)),
                scratch_shapes=[
                    pltpu.VMEM((b_pad, tile_f_eff), jnp.float32),  # segment-sum acc
                ],
            ),
            compiler_params=pltpu.CompilerParams(
                dimension_semantics=("parallel", "arbitrary"),
                vmem_limit_bytes=vmem_limit,
            ),
        )

    if want_third_buffer:
        try:
            out_padded = _build_call(True)(bidx2d, inv_counts, x_pad)
        except Exception:
            # pipeline_mode=Buffered(3) unsupported in this build -> default 2 buffers.
            out_padded = _build_call(False)(bidx2d, inv_counts, x_pad)
    else:
        out_padded = _build_call(False)(bidx2d, inv_counts, x_pad)

    return out_padded[:num_graphs, :F]


def _reference_readout(x, batch_index, num_graphs):
    # Pure-JAX reference mirroring the PyTorch loop-and-cat implementation.
    outs = []
    for i in range(num_graphs):
        m = (batch_index == i)
        cnt = jnp.sum(m.astype(jnp.float32))
        s = jnp.sum(jnp.where(m[:, None], x.astype(jnp.float32), 0.0), axis=0)
        outs.append((s / cnt)[None, :])
    return jnp.concatenate(outs, axis=0)


if __name__ == "__main__":
    key = jax.random.PRNGKey(0)
    k1, k2 = jax.random.split(key)

    # Test 1: small shapes matching the module's typical use (2 graphs).
    N1, F1, B1 = 8, 32, 2
    x1 = jax.random.normal(k1, (N1, F1), dtype=jnp.float32)
    bidx1 = jnp.array([0, 0, 0, 0, 1, 1, 1, 1], dtype=jnp.int32)

    out1 = jax.block_until_ready(readout(x1, bidx1, B1))
    ref1 = _reference_readout(x1, bidx1, B1)
    assert out1.shape == (B1, F1)
    assert jnp.allclose(out1, ref1.astype(out1.dtype), atol=5e-3, rtol=5e-3)

    # Test 2: non-aligned shapes + small explicit tiles to exercise the 2-D
    # grid, accumulator init/finalize, multi-buffered x path and wrapper
    # padding/slicing.
    sizes = (70, 50, 90, 60, 30)
    N2, F2, B2 = sum(sizes), 200, len(sizes)
    x2 = jax.random.normal(k2, (N2, F2), dtype=jnp.float32)
    bidx2 = jnp.repeat(jnp.arange(B2, dtype=jnp.int32), jnp.array(sizes))

    out2 = jax.block_until_ready(readout(x2, bidx2, B2, tile_n=128, tile_f=128))
    ref2 = _reference_readout(x2, bidx2, B2)
    assert out2.shape == (B2, F2)
    assert jnp.allclose(out2, ref2.astype(out2.dtype), atol=5e-3, rtol=5e-3)

    # Test 3: auto (per-generation) tiling on a non-128-aligned medium shape.
    N3, F3, B3 = 300, 200, 5
    out3 = jax.block_until_ready(readout(x2, bidx2, B3))
    assert out3.shape == (B3, F3)
    assert jnp.allclose(out3, ref2.astype(out3.dtype), atol=5e-3, rtol=5e-3)

    print("KERNEL_OK")
</pallas_src>

<mosaic_0001>
module attributes {stable_mosaic.version = 11 : i64} {
  func.func @_readout_kernel(%arg0: i32, %arg1: i32, %arg2: memref<1x128xi32, #tpu.memory_space<vmem>>, %arg3: memref<8x1xf32, #tpu.memory_space<vmem>>, %arg4: memref<128x128xf32, #tpu.memory_space<vmem>>, %arg5: memref<8x128xf32, #tpu.memory_space<vmem>>, %arg6: memref<8x128xf32, #tpu.memory_space<vmem>>) attributes {dimension_semantics = [#tpu.dimension_semantics<parallel>, #tpu.dimension_semantics<arbitrary>], iteration_bounds = array<i64: 1, 1>, scalar_prefetch = 0 : i64, scratch_operands = 1 : i64, tpu.core_type = #tpu.core_type<tc>, window_params = [{transform_indices = @transform_0, window_bounds = array<i64: 1, 128>}, {pipeline_mode = #tpu.pipeline_mode<synchronous>, transform_indices = @transform_1, window_bounds = array<i64: 8, 1>}, {transform_indices = @transform_2, window_bounds = array<i64: 128, 128>}, {transform_indices = @transform_3, window_bounds = array<i64: 8, 128>}]} {
    %c0_i32 = arith.constant 0 : i32
    %0 = arith.cmpi eq, %arg1, %c0_i32 : i32
    %1 = arith.extui %0 : i1 to i32
    %c0_i32_0 = arith.constant 0 : i32
    %2 = arith.cmpi ne, %1, %c0_i32_0 : i32
    scf.if %2 {
      %cst_10 = arith.constant 0.000000e+00 : f32
      %17 = vector.broadcast %cst_10 : f32 to vector<8x128xf32>
      %c0_11 = arith.constant 0 : index
      %c0_12 = arith.constant 0 : index
      %18 = vector.load %arg6[%c0_11, %c0_12] : memref<8x128xf32, #tpu.memory_space<vmem>>, vector<8x128xf32>
      tpu.vector_store %arg6[%c0_11, %c0_12], %17 {strides = array<i32>} : memref<8x128xf32, #tpu.memory_space<vmem>>, vector<8x128xf32>,
    } else {
    }
    %c0 = arith.constant 0 : index
    %c0_1 = arith.constant 0 : index
    %3 = vector.load %arg2[%c0, %c0_1] : memref<1x128xi32, #tpu.memory_space<vmem>>, vector<1x128xi32>
    %4 = tpu.iota {dimensions = array<i32: 0>} : vector<8x128xi32>
    %5 = vector.broadcast %3 : vector<1x128xi32> to vector<8x128xi32>
    %6 = arith.cmpi eq, %4, %5 : vector<8x128xi32>
    %7 = arith.extui %6 : vector<8x128xi1> to vector<8x128xi32>
    %8 = arith.sitofp %7 : vector<8x128xi32> to vector<8x128xf32>
    %c0_2 = arith.constant 0 : index
    %c0_3 = arith.constant 0 : index
    %9 = vector.load %arg6[%c0_2, %c0_3] : memref<8x128xf32, #tpu.memory_space<vmem>>, vector<8x128xf32>
    %c0_4 = arith.constant 0 : index
    %c0_5 = arith.constant 0 : index
    %10 = vector.load %arg4[%c0_4, %c0_5] : memref<128x128xf32, #tpu.memory_space<vmem>>, vector<128x128xf32>
    %cst = arith.constant dense<0.000000e+00> : vector<8x128xf32>
    %11 = tpu.matmul %8, %10, %cst {dimension_numbers = #tpu.dot_dimension_numbers<[1], [0], [0], [1], [0, 0, 1, 1], [], []>} : vector<8x128xf32>, vector<128x128xf32>, vector<8x128xf32> -> vector<8x128xf32>
    %12 = arith.addf %9, %11 : vector<8x128xf32>
    %c0_6 = arith.constant 0 : index
    %c0_7 = arith.constant 0 : index
    %13 = vector.load %arg6[%c0_6, %c0_7] : memref<8x128xf32, #tpu.memory_space<vmem>>, vector<8x128xf32>
    tpu.vector_store %arg6[%c0_6, %c0_7], %12 {strides = array<i32>} : memref<8x128xf32, #tpu.memory_space<vmem>>, vector<8x128xf32>,
    %c0_i32_8 = arith.constant 0 : i32
    %14 = arith.cmpi eq, %arg1, %c0_i32_8 : i32
    %15 = arith.extui %14 : i1 to i32
    %c0_i32_9 = arith.constant 0 : i32
    %16 = arith.cmpi ne, %15, %c0_i32_9 : i32
    scf.if %16 {
      %c0_10 = arith.constant 0 : index
      %c0_11 = arith.constant 0 : index
      %17 = vector.load %arg6[%c0_10, %c0_11] : memref<8x128xf32, #tpu.memory_space<vmem>>, vector<8x128xf32>
      %c0_12 = arith.constant 0 : index
      %c0_13 = arith.constant 0 : index
      %18 = vector.load %arg3[%c0_12, %c0_13] : memref<8x1xf32, #tpu.memory_space<vmem>>, vector<8x1xf32>
      %19 = vector.broadcast %18 : vector<8x1xf32> to vector<8x128xf32>
      %20 = arith.mulf %17, %19 : vector<8x128xf32>
      %c0_14 = arith.constant 0 : index
      %c0_15 = arith.constant 0 : index
      %21 = vector.load %arg5[%c0_14, %c0_15] : memref<8x128xf32, #tpu.memory_space<vmem>>, vector<8x128xf32>
      tpu.vector_store %arg5[%c0_14, %c0_15], %20 {strides = array<i32>} : memref<8x128xf32, #tpu.memory_space<vmem>>, vector<8x128xf32>,
    } else {
    }
    return
  }
  func.func @transform_0(%arg0: i32, %arg1: i32) -> (i32, i32) {
    %c0_i32 = arith.constant 0 : i32
    %c0_i32_0 = arith.constant 0 : i32
    return %c0_i32, %arg1 : i32, i32
  }
  func.func @transform_1(%arg0: i32, %arg1: i32) -> (i32, i32) {
    %c0_i32 = arith.constant 0 : i32
    %c0_i32_0 = arith.constant 0 : i32
    %c0_i32_1 = arith.constant 0 : i32
    return %c0_i32, %c0_i32_0 : i32, i32
  }
  func.func @transform_2(%arg0: i32, %arg1: i32) -> (i32, i32) {
    %c0_i32 = arith.constant 0 : i32
    return %arg1, %arg0 : i32, i32
  }
  func.func @transform_3(%arg0: i32, %arg1: i32) -> (i32, i32) {
    %c0_i32 = arith.constant 0 : i32
    %c0_i32_0 = arith.constant 0 : i32
    return %c0_i32, %arg0 : i32, i32
  }
}

</mosaic_0001>

<llo_original>
// kernel: tpu_custom_call.1
$region0: #{tpu_custom_call.1}
  #allocation0 [shape = 'u32[]', space=smem, size = 0x4, offset = 0x4, fixed_abs, tag = 'smem constant byte address 0x4 - core index']
  #allocation1 [shape = 'u32[72,128]{1,0:T(1,128)}', space=vmem, size = 0x9000, scoped, tag = 'internal scratch']
  #allocation2 [shape = 'f32[8,128]{1,0:T(8,128)}', space=vmem, size = 0x1000, scoped, tag = 'scratch operand']
  %s0 = inlined_call_operand.vmem [shape: s32[1,128], index: 0, kind: input, shape index: {}]
  %s1 = inlined_call_operand.vmem [shape: f32[8,1], index: 1, kind: input, shape index: {}]
  %s2 = inlined_call_operand.hbm [shape: f32[128,128], index: 2, kind: input, shape index: {}]
  %s3 = inlined_call_operand.hbm [shape: f32[8,128], index: 3, kind: output, shape index: {}]
  %s4 = sld [smem:[#allocation0]]
  $region34: #{tpu_custom_call.1} parent=0
    _
  %s6 = ssub.s32 1, %s4
  %s7 = scalar_select 0, %s6, %s4
  $region1: #{tpu_custom_call.1} parent=0
    #allocation3 [shape = 'u8[65536]{0}', space=vmem, size = 0x10000, scoped, tag = 'input window, operand 2, single buffered']
    #allocation4 [shape = 's32[1]{0}', space=sflag, size = 0x4, scoped, tag = 'scoped memory for tpu_custom_call.1']
    #allocation5 [shape = 's32[1]{0}', space=sflag, size = 0x4, scoped, tag = 'scoped memory for tpu_custom_call.1']
    #allocation6 [shape = 'u8[4096]{0}', space=vmem, size = 0x1000, scoped, tag = 'output window, operand 0, single buffered']
    %8 = vsyncpa [#allocation4], 0
    %9 = vsyncpa [#allocation5], 0
    // Predicated region
    $region2: #{tpu_custom_call.1} parent=1 // pred_check
      _
    $region3: #{tpu_custom_call.1} parent=1 // pred_check_branch
      %11 = sbr.rel (0) target = $region5
    $region4: #{tpu_custom_call.1} parent=1 // pred_region
      _
    $region5: #{tpu_custom_call.1} parent=1 // pred_fallthru
      _
    // Predicated region
    $region6: #{tpu_custom_call.1} parent=1 // pred_check
      _
    $region7: #{tpu_custom_call.1} parent=1 // pred_check_branch
      %13 = sbr.rel (0) target = $region9
    $region8: #{tpu_custom_call.1} parent=1 // pred_region
      _
    $region9: #{tpu_custom_call.1} parent=1 // pred_fallthru
      _
    // Predicated region
    $region10: #{tpu_custom_call.1} parent=1 // pred_check
      _
    $region11: #{tpu_custom_call.1} parent=1 // pred_check_branch
      %15 = sbr.rel (0) target = $region13
    $region12: #{tpu_custom_call.1} parent=1 // pred_region
      %17 = vsyncadd [#allocation4], 0
      %s18 = sshll.u32 %s2, 4
      %s19 = int_to_ptr.hbm [resolvable:$true] %s18
      %s20 = sshll.u32 [#allocation3], 4
      %s21 = int_to_ptr.vmem [resolvable:$true] %s20
      %26 = dma.hbm_to_vmem [thread:$0]  %s19, 2048, %s21, [#allocation4], 128, 128, 8
    $region13: #{tpu_custom_call.1} parent=1 // pred_fallthru
      _
    // Predicated region
    $region14: #{tpu_custom_call.1} parent=1 // pred_check
      _
    $region15: #{tpu_custom_call.1} parent=1 // pred_check_branch
      %28 = sbr.rel (0) target = $region17
    $region16: #{tpu_custom_call.1} parent=1 // pred_region
      %30 = dma.done [#allocation4], 2048
    $region17: #{tpu_custom_call.1} parent=1 // pred_fallthru
      _
    %p31 = scmp.eq.s32.totalorder 0, 0
    // Predicated region
    $region18: #{tpu_custom_call.1} parent=1 // pred_check
      %p32 = pneg %p31
    $region19: #{tpu_custom_call.1} parent=1 // pred_check_branch
      %34 = sbr.rel (%p32) target = $region21
    $region20: #{tpu_custom_call.1} parent=1 // pred_region
      %35 = vst [vmem:[#allocation2] sm:$0xff] 0.0
    $region21: #{tpu_custom_call.1} parent=1 // pred_fallthru
      _
    %v36 = vld [vmem:[%s0] sm:$0x1]
    %v37 = vlaneseq
    %v38 = vshrl.u32 %v37, 7
    %v39 = vperm.slane %v36, 0
    %vm40 = vcmp.eq.s32.totalorder %v38, %v39
    %v41 = vsel %vm40, 1, 0
    %v42 = vcvt.s32.f32 %v41
    %v43 = vld [vmem:[#allocation2] sm:$0xff]
    %v44 = vld [vmem:[#allocation3] sm:$0xff]
    %v45 = vld [vmem:[#allocation3 + $0x8] sm:$0xff]
    %v46 = vld [vmem:[#allocation3 + $0x10] sm:$0xff]
    %v47 = vld [vmem:[#allocation3 + $0x18] sm:$0xff]
    %v48 = vld [vmem:[#allocation3 + $0x20] sm:$0xff]
    %v49 = vld [vmem:[#allocation3 + $0x28] sm:$0xff]
    %v50 = vld [vmem:[#allocation3 + $0x30] sm:$0xff]
    %v51 = vld [vmem:[#allocation3 + $0x38] sm:$0xff]
    %v52 = vld [vmem:[#allocation3 + $0x40] sm:$0xff]
    %v53 = vld [vmem:[#allocation3 + $0x48] sm:$0xff]
    %v54 = vld [vmem:[#allocation3 + $0x50] sm:$0xff]
    %v55 = vld [vmem:[#allocation3 + $0x58] sm:$0xff]
    %v56 = vld [vmem:[#allocation3 + $0x60] sm:$0xff]
    %v57 = vld [vmem:[#allocation3 + $0x68] sm:$0xff]
    %v58 = vld [vmem:[#allocation3 + $0x70] sm:$0xff]
    %v59 = vld [vmem:[#allocation3 + $0x78] sm:$0xff]
    %60 = vmatpush.msra.mxu0 %v59
    %61 = vmatpush.msra.mxu0 %v58
    %62 = vmatpush.msra.mxu0 %v57
    %63 = vmatpush.msra.mxu0 %v56
    %64 = vmatpush.msra.mxu0 %v55
    %65 = vmatpush.msra.mxu0 %v54
    %66 = vmatpush.msra.mxu0 %v53
    %67 = vmatpush.msra.mxu0 %v52
    %68 = vmatpush.msra.mxu0 %v51
    %69 = vmatpush.msra.mxu0 %v50
    %70 = vmatpush.msra.mxu0 %v49
    %71 = vmatpush.msra.mxu0 %v48
    %72 = vmatpush.msra.mxu0 %v47
    %73 = vmatpush.msra.mxu0 %v46
    %74 = vmatpush.msra.mxu0 %v45
    %75 = vmatpush.msra.mxu0 %v44
    %76 = vmatmul.f32.gmra.mxu0 %v42
    %v77 = vpop.f32.mrf.mxu0
    %v78 = vadd.f32 0.0, %v77
    %79 = vdwg.mxu0
    %v80 = vadd.f32 %v43, %v78
    %81 = vst [vmem:[#allocation2] sm:$0xff] %v80
    // Predicated region
    $region22: #{tpu_custom_call.1} parent=1 // pred_check
      %p82 = pneg %p31
    $region23: #{tpu_custom_call.1} parent=1 // pred_check_branch
      %84 = sbr.rel (%p82) target = $region25
    $region24: #{tpu_custom_call.1} parent=1 // pred_region
      %v85 = vld [vmem:[#allocation2] sm:$0xff]
      %v86 = vld [vmem:[%s1] sm:$0xff]
      %88 = vset.pattern.permute.xlu0 0
      %89 = vperm.xlu0 %88, %v86
      %v90 = vpop.permute.xlu0 %89
      %v92 = vmul.f32 %v85, %v90
      %93 = vst [vmem:[#allocation6] sm:$0xff] %v92
    $region25: #{tpu_custom_call.1} parent=1 // pred_fallthru
      _
    // Predicated region
    $region26: #{tpu_custom_call.1} parent=1 // pred_check
      _
    $region27: #{tpu_custom_call.1} parent=1 // pred_check_branch
      %95 = sbr.rel (0) target = $region29
    $region28: #{tpu_custom_call.1} parent=1 // pred_region
      %97 = vsyncadd [#allocation5], 0
      %s99 = sshll.u32 [#allocation6], 4
      %s100 = int_to_ptr.vmem [resolvable:$true] %s99
      %s101 = sshll.u32 %s3, 4
      %s102 = int_to_ptr.hbm [resolvable:$true] %s101
      %104 = dma.vmem_to_hbm [thread:$0]  %s100, 128, %s102, [#allocation5]
    $region29: #{tpu_custom_call.1} parent=1 // pred_fallthru
      _
    // Predicated region
    $region30: #{tpu_custom_call.1} parent=1 // pred_check
      _
    $region31: #{tpu_custom_call.1} parent=1 // pred_check_branch
      %106 = sbr.rel (0) target = $region33
    $region32: #{tpu_custom_call.1} parent=1 // pred_region
      %108 = dma.done [#allocation5], 128
    $region33: #{tpu_custom_call.1} parent=1 // pred_fallthru
      _
    %109 = vsyncpa [#allocation4], 1
    %110 = vsyncpa [#allocation5], 1

</llo_original>
